<compile_context>
chip_gen: v6e
topology: v6e:2x2x1
jax: 0.10.0
libtpu: 0.0.40
codegen_flags: <defaults>
</compile_context>

<pallas_src>
import jax
import jax.numpy as jnp
from jax.experimental import pallas as pl
from jax.experimental.pallas import tpu as pltpu


def _critic_twin_kernel(xT_ref, w0t_ref, b0t_ref, wpt_ref, bpt_ref, qT_ref):
    # h0T = relu(w0T @ xT + b0T)          (d0, tb)  -- batch in lanes
    h0 = jnp.dot(w0t_ref[...], xT_ref[...], preferred_element_type=jnp.float32)
    h0 = jnp.maximum(h0 + b0t_ref[...], 0.0)
    # qT = wpT @ h0T + bpT                (2, tb)   -- lane-dense output store
    q = jnp.dot(wpt_ref[...], h0, preferred_element_type=jnp.float32)
    qT_ref[...] = (q + bpt_ref[...]).astype(qT_ref.dtype)


def fold_params(params):
    """Fold enc Linear #2 (no activation) and both decoder heads; store transposed.

    Returns w0t (d0, F), b0t (d0, 1), wpt (2, d0), bpt (2, 1), all float32.
    The folding is algebraically exact (only fp32 reassociation differs).
    """
    wq = jnp.concatenate([params["wq1"], params["wq2"]], axis=1)   # (d1, 2)
    bq = jnp.concatenate([params["bq1"], params["bq2"]], axis=1)   # (1, 2)
    wp = params["w1"] @ wq                                         # (d0, 2)
    bp = params["b1"] @ wq + bq                                    # (1, 2)
    return dict(
        w0t=jnp.asarray(params["w0"].T, jnp.float32),              # (d0, F)
        b0t=jnp.asarray(params["b0"].T, jnp.float32),              # (d0, 1)
        wpt=jnp.asarray(wp.T, jnp.float32),                        # (2, d0)
        bpt=jnp.asarray(bp.T, jnp.float32),                        # (2, 1)
    )


def critic_twin_get_q1_q2_t(value_t, folded, *, block_b=8192):
    """Fused twin-critic MLP, batch-in-lanes layout.

    value_t: (F, B) float32 with F = state_dim + action_dim (batch on the lane axis).
    Returns (q1, q2), each (B, 1) float32.
    """
    F, B = value_t.shape
    d0 = folded["w0t"].shape[0]

    # Batch tile: either the full batch (legal as "full array dim") or a multiple
    # of 128 (lane width), regardless of what the caller passed for block_b.
    if B <= block_b:
        tb = B
    else:
        tb = max(128, (block_b // 128) * 128)
    grid = (pl.cdiv(B, tb),)

    cost = pl.CostEstimate(
        flops=2 * B * (F * d0 + d0 * 2),
        transcendentals=0,
        bytes_accessed=4 * (F * B + 2 * B + d0 * F + d0 + 2 * d0 + 2),
    )

    qT = pl.pallas_call(
        _critic_twin_kernel,
        out_shape=jax.ShapeDtypeStruct((2, B), jnp.float32),
        grid=grid,
        in_specs=[
            pl.BlockSpec((F, tb), lambda i: (0, i)),    # value tile (pipelined over batch)
            pl.BlockSpec((d0, F), lambda i: (0, 0)),    # w0^T   (VMEM-resident)
            pl.BlockSpec((d0, 1), lambda i: (0, 0)),    # b0^T
            pl.BlockSpec((2, d0), lambda i: (0, 0)),    # W'^T (folded w1 + both heads)
            pl.BlockSpec((2, 1), lambda i: (0, 0)),     # b'^T
        ],
        out_specs=pl.BlockSpec((2, tb), lambda i: (0, i)),
        compiler_params=pltpu.CompilerParams(
            dimension_semantics=("parallel",)),
        cost_estimate=cost,
    )(value_t, folded["w0t"], folded["b0t"], folded["wpt"], folded["bpt"])

    # Tiny (2, B) slab; the slices/transposes below are negligible XLA ops.
    return qT[0:1, :].T, qT[1:2, :].T


def critic_twin_forward_t(value_t, folded, **kw):
    """Equivalent of CriticTwin.forward for (F, B) input: returns q1 only, (B, 1)."""
    q1, _ = critic_twin_get_q1_q2_t(value_t, folded, **kw)
    return q1


def critic_twin_get_q1_q2(value, folded, **kw):
    """Drop-in (B, F) wrapper. NOTE: the transpose here is an extra HBM pass over
    the input; prefer producing the (F, B) layout at the caller and using
    critic_twin_get_q1_q2_t directly."""
    return critic_twin_get_q1_q2_t(value.T, folded, **kw)


def init_params(key, state_dim, action_dim, dims):
    """Deterministic synthetic init (uniform, PyTorch-Linear-like fan_in scaling).

    Weights are stored (in_features, out_features) so y = x @ W + b.
    """
    assert len(dims) == 2, "this kernel implements the 2-hidden-layer enc_sa"
    sa_dim = state_dim + action_dim
    sizes = [sa_dim, *dims]
    ks = jax.random.split(key, 8)

    def lin(kw_, kb_, fan_in, fan_out):
        bound = 1.0 / jnp.sqrt(jnp.float32(fan_in))
        w = jax.random.uniform(kw_, (fan_in, fan_out), jnp.float32, -bound, bound)
        b = jax.random.uniform(kb_, (1, fan_out), jnp.float32, -bound, bound)
        return w, b

    w0, b0 = lin(ks[0], ks[1], sizes[0], sizes[1])
    w1, b1 = lin(ks[2], ks[3], sizes[1], sizes[2])
    wq1, bq1 = lin(ks[4], ks[5], sizes[2], 1)
    wq2, bq2 = lin(ks[6], ks[7], sizes[2], 1)
    return dict(w0=w0, b0=b0, w1=w1, b1=b1,
                wq1=wq1, bq1=bq1, wq2=wq2, bq2=bq2)


def reference_get_q1_q2(value, p):
    """Pure-JAX reference of the original (un-folded, un-transposed) module."""
    h0 = jnp.maximum(value @ p["w0"] + p["b0"], 0.0)
    sa = h0 @ p["w1"] + p["b1"]
    return sa @ p["wq1"] + p["bq1"], sa @ p["wq2"] + p["bq2"]


if __name__ == "__main__":
    key = jax.random.PRNGKey(0)
    k_par, k_s, k_a, k_s2, k_a2 = jax.random.split(key, 5)

    state_dim, action_dim = 10, 3
    dims = [32, 32]

    params = init_params(k_par, state_dim, action_dim, dims)
    folded = fold_params(params)   # done once, offline w.r.t. the kernel calls

    # --- small batch: single grid step, tb == B (full-dim block) ---
    batch = 8
    state_t = jax.random.normal(k_s, (state_dim, batch), jnp.float32)
    action_t = jax.random.normal(k_a, (action_dim, batch), jnp.float32)
    value_t = jnp.concatenate([state_t, action_t], axis=0)   # (F, B) batch-in-lanes

    q1, q2 = critic_twin_get_q1_q2_t(value_t, folded)
    q1 = jax.block_until_ready(q1)
    q2 = jax.block_until_ready(q2)

    r1, r2 = reference_get_q1_q2(value_t.T, params)
    assert q1.shape == (batch, 1) and q2.shape == (batch, 1)
    assert jnp.allclose(q1, r1, atol=1e-5, rtol=1e-5)
    assert jnp.allclose(q2, r2, atol=1e-5, rtol=1e-5)

    # forward() path (q1 only)
    q_fwd = jax.block_until_ready(critic_twin_forward_t(value_t, folded))
    assert jnp.allclose(q_fwd, r1, atol=1e-5, rtol=1e-5)

    # --- larger batch with a small explicit tile: exercises multi-step grid
    #     (tb=256, grid=2) including a partial last tile ---
    batch2 = 300
    value2_t = jnp.concatenate(
        [jax.random.normal(k_s2, (state_dim, batch2), jnp.float32),
         jax.random.normal(k_a2, (action_dim, batch2), jnp.float32)], axis=0)
    q1b, q2b = critic_twin_get_q1_q2_t(value2_t, folded, block_b=256)
    q1b = jax.block_until_ready(q1b)
    q2b = jax.block_until_ready(q2b)
    r1b, r2b = reference_get_q1_q2(value2_t.T, params)
    assert jnp.allclose(q1b, r1b, atol=1e-5, rtol=1e-5)
    assert jnp.allclose(q2b, r2b, atol=1e-5, rtol=1e-5)

    # --- (B, F) drop-in compatibility wrapper ---
    q1c, q2c = critic_twin_get_q1_q2(value2_t.T, folded)
    q1c = jax.block_until_ready(q1c)
    q2c = jax.block_until_ready(q2c)
    assert jnp.allclose(q1c, r1b, atol=1e-5, rtol=1e-5)
    assert jnp.allclose(q2c, r2b, atol=1e-5, rtol=1e-5)

    print("KERNEL_OK")
</pallas_src>

<mosaic_0001>
module attributes {stable_mosaic.version = 11 : i64} {
  func.func @_critic_twin_kernel(%arg0: i32, %arg1: memref<13x8xf32, #tpu.memory_space<vmem>>, %arg2: memref<32x13xf32, #tpu.memory_space<vmem>>, %arg3: memref<32x1xf32, #tpu.memory_space<vmem>>, %arg4: memref<2x32xf32, #tpu.memory_space<vmem>>, %arg5: memref<2x1xf32, #tpu.memory_space<vmem>>, %arg6: memref<2x8xf32, #tpu.memory_space<vmem>>) attributes {dimension_semantics = [#tpu.dimension_semantics<parallel>], iteration_bounds = array<i64: 1>, scalar_prefetch = 0 : i64, scratch_operands = 0 : i64, tpu.core_type = #tpu.core_type<tc>, window_params = [{transform_indices = @transform_0, window_bounds = array<i64: 13, 8>}, {pipeline_mode = #tpu.pipeline_mode<synchronous>, transform_indices = @transform_1, window_bounds = array<i64: 32, 13>}, {pipeline_mode = #tpu.pipeline_mode<synchronous>, transform_indices = @transform_2, window_bounds = array<i64: 32, 1>}, {pipeline_mode = #tpu.pipeline_mode<synchronous>, transform_indices = @transform_3, window_bounds = array<i64: 2, 32>}, {pipeline_mode = #tpu.pipeline_mode<synchronous>, transform_indices = @transform_4, window_bounds = array<i64: 2, 1>}, {transform_indices = @transform_5, window_bounds = array<i64: 2, 8>}]} {
    %c0 = arith.constant 0 : index
    %c0_0 = arith.constant 0 : index
    %0 = vector.load %arg2[%c0, %c0_0] : memref<32x13xf32, #tpu.memory_space<vmem>>, vector<32x13xf32>
    %c0_1 = arith.constant 0 : index
    %c0_2 = arith.constant 0 : index
    %1 = vector.load %arg1[%c0_1, %c0_2] : memref<13x8xf32, #tpu.memory_space<vmem>>, vector<13x8xf32>
    %cst = arith.constant dense<0.000000e+00> : vector<32x8xf32>
    %2 = tpu.matmul %0, %1, %cst {dimension_numbers = #tpu.dot_dimension_numbers<[1], [0], [0], [1], [0, 0, 1, 1], [], []>} : vector<32x13xf32>, vector<13x8xf32>, vector<32x8xf32> -> vector<32x8xf32>
    %c0_3 = arith.constant 0 : index
    %c0_4 = arith.constant 0 : index
    %3 = vector.load %arg3[%c0_3, %c0_4] : memref<32x1xf32, #tpu.memory_space<vmem>>, vector<32x1xf32>
    %4 = vector.broadcast %3 : vector<32x1xf32> to vector<32x8xf32>
    %5 = arith.addf %2, %4 : vector<32x8xf32>
    %cst_5 = arith.constant 0.000000e+00 : f32
    %6 = vector.broadcast %cst_5 : f32 to vector<32x8xf32>
    %7 = arith.maximumf %5, %6 : vector<32x8xf32>
    %c0_6 = arith.constant 0 : index
    %c0_7 = arith.constant 0 : index
    %8 = vector.load %arg4[%c0_6, %c0_7] : memref<2x32xf32, #tpu.memory_space<vmem>>, vector<2x32xf32>
    %cst_8 = arith.constant dense<0.000000e+00> : vector<2x8xf32>
    %9 = tpu.matmul %8, %7, %cst_8 {dimension_numbers = #tpu.dot_dimension_numbers<[1], [0], [0], [1], [0, 0, 1, 1], [], []>} : vector<2x32xf32>, vector<32x8xf32>, vector<2x8xf32> -> vector<2x8xf32>
    %c0_9 = arith.constant 0 : index
    %c0_10 = arith.constant 0 : index
    %10 = vector.load %arg5[%c0_9, %c0_10] : memref<2x1xf32, #tpu.memory_space<vmem>>, vector<2x1xf32>
    %11 = vector.broadcast %10 : vector<2x1xf32> to vector<2x8xf32>
    %12 = arith.addf %9, %11 : vector<2x8xf32>
    %c0_11 = arith.constant 0 : index
    %c0_12 = arith.constant 0 : index
    %13 = vector.load %arg6[%c0_11, %c0_12] : memref<2x8xf32, #tpu.memory_space<vmem>>, vector<2x8xf32>
    tpu.vector_store %arg6[%c0_11, %c0_12], %12 {strides = array<i32>} : memref<2x8xf32, #tpu.memory_space<vmem>>, vector<2x8xf32>,
    return
  }
  func.func @transform_0(%arg0: i32) -> (i32, i32) {
    %c0_i32 = arith.constant 0 : i32
    %c0_i32_0 = arith.constant 0 : i32
    return %c0_i32, %arg0 : i32, i32
  }
  func.func @transform_1(%arg0: i32) -> (i32, i32) {
    %c0_i32 = arith.constant 0 : i32
    %c0_i32_0 = arith.constant 0 : i32
    %c0_i32_1 = arith.constant 0 : i32
    return %c0_i32, %c0_i32_0 : i32, i32
  }
  func.func @transform_2(%arg0: i32) -> (i32, i32) {
    %c0_i32 = arith.constant 0 : i32
    %c0_i32_0 = arith.constant 0 : i32
    %c0_i32_1 = arith.constant 0 : i32
    return %c0_i32, %c0_i32_0 : i32, i32
  }
  func.func @transform_3(%arg0: i32) -> (i32, i32) {
    %c0_i32 = arith.constant 0 : i32
    %c0_i32_0 = arith.constant 0 : i32
    %c0_i32_1 = arith.constant 0 : i32
    return %c0_i32, %c0_i32_0 : i32, i32
  }
  func.func @transform_4(%arg0: i32) -> (i32, i32) {
    %c0_i32 = arith.constant 0 : i32
    %c0_i32_0 = arith.constant 0 : i32
    %c0_i32_1 = arith.constant 0 : i32
    return %c0_i32, %c0_i32_0 : i32, i32
  }
  func.func @transform_5(%arg0: i32) -> (i32, i32) {
    %c0_i32 = arith.constant 0 : i32
    %c0_i32_0 = arith.constant 0 : i32
    return %c0_i32, %arg0 : i32, i32
  }
}

</mosaic_0001>

<llo_original>
// kernel: tpu_custom_call.1
$region0: #{tpu_custom_call.1}
  #allocation0 [shape = 'u32[]', space=smem, size = 0x4, offset = 0x4, fixed_abs, tag = 'smem constant byte address 0x4 - core index']
  #allocation1 [shape = 'u32[144,128]{1,0:T(1,128)}', space=vmem, size = 0x12000, scoped, tag = 'internal scratch']
  %s0 = inlined_call_operand.vmem [shape: f32[13,8], index: 0, kind: input, shape index: {}]
  %s1 = inlined_call_operand.vmem [shape: f32[32,13], index: 1, kind: input, shape index: {}]
  %s2 = inlined_call_operand.vmem [shape: f32[32,1], index: 2, kind: input, shape index: {}]
  %s3 = inlined_call_operand.vmem [shape: f32[2,32], index: 3, kind: input, shape index: {}]
  %s4 = inlined_call_operand.vmem [shape: f32[2,1], index: 4, kind: input, shape index: {}]
  %s5 = inlined_call_operand.hbm [shape: f32[2,8], index: 5, kind: output, shape index: {}]
  %s6 = sld [smem:[#allocation0]]
  $region30: #{tpu_custom_call.1} parent=0
    _
  %s8 = ssub.s32 1, %s6
  %s9 = scalar_select 0, %s8, %s6
  $region1: #{tpu_custom_call.1} parent=0
    #allocation2 [shape = 'u8[1024]{0}', space=vmem, size = 0x400, scoped, tag = 'output window, operand 0, single buffered']
    #allocation3 [shape = 's32[1]{0}', space=sflag, size = 0x4, scoped, tag = 'scoped memory for tpu_custom_call.1']
    %10 = vsyncpa [#allocation3], 0
    // Predicated region
    $region2: #{tpu_custom_call.1} parent=1 // pred_check
      _
    $region3: #{tpu_custom_call.1} parent=1 // pred_check_branch
      %12 = sbr.rel (0) target = $region5
    $region4: #{tpu_custom_call.1} parent=1 // pred_region
      _
    $region5: #{tpu_custom_call.1} parent=1 // pred_fallthru
      _
    // Predicated region
    $region6: #{tpu_custom_call.1} parent=1 // pred_check
      _
    $region7: #{tpu_custom_call.1} parent=1 // pred_check_branch
      %14 = sbr.rel (0) target = $region9
    $region8: #{tpu_custom_call.1} parent=1 // pred_region
      _
    $region9: #{tpu_custom_call.1} parent=1 // pred_fallthru
      _
    // Predicated region
    $region10: #{tpu_custom_call.1} parent=1 // pred_check
      _
    $region11: #{tpu_custom_call.1} parent=1 // pred_check_branch
      %16 = sbr.rel (0) target = $region13
    $region12: #{tpu_custom_call.1} parent=1 // pred_region
      _
    $region13: #{tpu_custom_call.1} parent=1 // pred_fallthru
      _
    // Predicated region
    $region14: #{tpu_custom_call.1} parent=1 // pred_check
      _
    $region15: #{tpu_custom_call.1} parent=1 // pred_check_branch
      %18 = sbr.rel (0) target = $region17
    $region16: #{tpu_custom_call.1} parent=1 // pred_region
      _
    $region17: #{tpu_custom_call.1} parent=1 // pred_fallthru
      _
    // Predicated region
    $region18: #{tpu_custom_call.1} parent=1 // pred_check
      _
    $region19: #{tpu_custom_call.1} parent=1 // pred_check_branch
      %20 = sbr.rel (0) target = $region21
    $region20: #{tpu_custom_call.1} parent=1 // pred_region
      _
    $region21: #{tpu_custom_call.1} parent=1 // pred_fallthru
      _
    %v21 = vld [vmem:[%s1] sm:$0xff]
    %v22 = vld [vmem:[%s1 + $0x8] sm:$0xff]
    %v23 = vld [vmem:[%s1 + $0x10] sm:$0xff]
    %v24 = vld [vmem:[%s1 + $0x18] sm:$0xff]
    %v25 = vld [vmem:[%s0] sm:$0xff]
    %v26 = vld [vmem:[%s0 + $0x8] sm:$0x1f]
    %v27 = vld [vmem:[%s2] sm:$0xff]
    %v28 = vld [vmem:[%s2 + $0x8] sm:$0xff]
    %v29 = vld [vmem:[%s2 + $0x10] sm:$0xff]
    %v30 = vld [vmem:[%s2 + $0x18] sm:$0xff]
    %32 = vset.pattern.permute.xlu0 0
    %33 = vperm.xlu0 %32, %v27
    %v34 = vpop.permute.xlu0 %33
    %37 = vset.pattern.permute.xlu0 0
    %38 = vperm.xlu0 %37, %v28
    %v39 = vpop.permute.xlu0 %38
    %42 = vset.pattern.permute.xlu0 0
    %43 = vperm.xlu0 %42, %v29
    %v44 = vpop.permute.xlu0 %43
    %47 = vset.pattern.permute.xlu0 0
    %48 = vperm.xlu0 %47, %v30
    %v49 = vpop.permute.xlu0 %48
    %vm51 = vcmask 105472
    %v53 = vsel %vm51, %v21, 0
    %v56 = vsel %vm51, %v22, 0
    %v59 = vsel %vm51, %v23, 0
    %v62 = vsel %vm51, %v24, 0
    %vm64 = vcmask 1044480
    %v66 = vsel %vm64, %v26, 0
    %68 = vmatprep.subr.mxu0 0.0
    %69 = vmatpush1.msra.mxu0 0.0
    %70 = vmatprep.subr.mxu0 0.0
    %71 = vmatpush1.msra.mxu0 0.0
    %72 = vmatprep.subr.mxu0 0.0
    %73 = vmatpush1.msra.mxu0 0.0
    %74 = vmatprep.subr.mxu0 0.0
    %75 = vmatpush1.msra.mxu0 0.0
    %76 = vmatprep.subr.mxu0 0.0
    %77 = vmatpush1.msra.mxu0 0.0
    %78 = vmatprep.subr.mxu0 0.0
    %79 = vmatpush1.msra.mxu0 0.0
    %80 = vmatprep.subr.mxu0 0.0
    %81 = vmatpush1.msra.mxu0 0.0
    %82 = vmatprep.subr.mxu0 0.0
    %83 = vmatpush1.msra.mxu0 0.0
    %84 = vmatprep.subr.mxu0 0.0
    %85 = vmatpush1.msra.mxu0 0.0
    %86 = vmatprep.subr.mxu0 0.0
    %87 = vmatpush1.msra.mxu0 0.0
    %88 = vmatprep.subr.mxu0 0.0
    %89 = vmatpush1.msra.mxu0 0.0
    %90 = vmatprep.subr.mxu0 0.0
    %91 = vmatpush1.msra.mxu0 0.0
    %92 = vmatprep.subr.mxu0 0.0
    %93 = vmatpush1.msra.mxu0 0.0
    %94 = vmatprep.subr.mxu0 0.0
    %95 = vmatpush1.msra.mxu0 0.0
    %96 = vmatprep.subr.mxu0 0.0
    %97 = vmatpush1.msra.mxu0 %v66
    %98 = vmatprep.subr.mxu0 0.0
    %99 = vmatpush1.msra.mxu0 %v25
    %100 = vmatprep.subr.mxu0 0.0
    %101 = vmatpush2.msra.mxu0 0.0
    %102 = vmatprep.subr.mxu0 0.0
    %103 = vmatpush2.msra.mxu0 0.0
    %104 = vmatprep.subr.mxu0 0.0
    %105 = vmatpush2.msra.mxu0 0.0
    %106 = vmatprep.subr.mxu0 0.0
    %107 = vmatpush2.msra.mxu0 0.0
    %108 = vmatprep.subr.mxu0 0.0
    %109 = vmatpush2.msra.mxu0 0.0
    %110 = vmatprep.subr.mxu0 0.0
    %111 = vmatpush2.msra.mxu0 0.0
    %112 = vmatprep.subr.mxu0 0.0
    %113 = vmatpush2.msra.mxu0 0.0
    %114 = vmatprep.subr.mxu0 0.0
    %115 = vmatpush2.msra.mxu0 0.0
    %116 = vmatprep.subr.mxu0 0.0
    %117 = vmatpush2.msra.mxu0 0.0
    %118 = vmatprep.subr.mxu0 0.0
    %119 = vmatpush2.msra.mxu0 0.0
    %120 = vmatprep.subr.mxu0 0.0
    %121 = vmatpush2.msra.mxu0 0.0
    %122 = vmatprep.subr.mxu0 0.0
    %123 = vmatpush2.msra.mxu0 0.0
    %124 = vmatprep.subr.mxu0 0.0
    %125 = vmatpush2.msra.mxu0 0.0
    %126 = vmatprep.subr.mxu0 0.0
    %127 = vmatpush2.msra.mxu0 0.0
    %128 = vmatprep.subr.mxu0 0.0
    %129 = vmatpush2.msra.mxu0 0.0
    %130 = vmatprep.subr.mxu0 0.0
    %131 = vmatpush2.msra.mxu0 0.0
    %132 = vmatprep.mubr.f32.mxu0 0.0
    %133 = vmatmul.mubr.f32.gmra.mxu0 %v53
    %v134 = vpop.f32.mrf.mxu0
    %v135 = vadd.f32 %v34, %v134
    %v136 = vpop.f32.mrf.mxu0
    %137 = vmatprep.mubr.f32.mxu0 0.0
    %138 = vmatmul.mubr.f32.gmra.mxu0 %v56
    %v139 = vpop.f32.mrf.mxu0
    %v140 = vadd.f32 %v39, %v139
    %v141 = vpop.f32.mrf.mxu0
    %142 = vmatprep.mubr.f32.mxu0 0.0
    %143 = vmatmul.mubr.f32.gmra.mxu0 %v59
    %v144 = vpop.f32.mrf.mxu0
    %v145 = vadd.f32 %v44, %v144
    %v146 = vpop.f32.mrf.mxu0
    %147 = vmatprep.mubr.f32.mxu0 0.0
    %148 = vmatmul.mubr.f32.gmra.mxu0 %v62
    %v149 = vpop.f32.mrf.mxu0
    %v150 = vadd.f32 %v49, %v149
    %v151 = vpop.f32.mrf.mxu0
    %152 = vdwg.mxu0
    %v153 = vmax.f32 %v135, 0.0
    %v154 = vmax.f32 %v140, 0.0
    %v155 = vmax.f32 %v145, 0.0
    %v156 = vmax.f32 %v150, 0.0
    %v157 = vld [vmem:[%s3] sm:$0x3]
    %v158 = vld [vmem:[%s4] sm:$0x3]
    %160 = vset.pattern.permute.xlu0 0
    %161 = vperm.xlu0 %160, %v158
    %v162 = vpop.permute.xlu0 %161
    %vm164 = vcmask 261120
    %v166 = vsel %vm164, %v157, 0
    %168 = vmatprep.subr.mxu0 0.0
    %169 = vmatpush1.msra.mxu0 0.0
    %170 = vmatprep.subr.mxu0 0.0
    %171 = vmatpush1.msra.mxu0 0.0
    %172 = vmatprep.subr.mxu0 0.0
    %173 = vmatpush1.msra.mxu0 0.0
    %174 = vmatprep.subr.mxu0 0.0
    %175 = vmatpush1.msra.mxu0 0.0
    %176 = vmatprep.subr.mxu0 0.0
    %177 = vmatpush1.msra.mxu0 0.0
    %178 = vmatprep.subr.mxu0 0.0
    %179 = vmatpush1.msra.mxu0 0.0
    %180 = vmatprep.subr.mxu0 0.0
    %181 = vmatpush1.msra.mxu0 0.0
    %182 = vmatprep.subr.mxu0 0.0
    %183 = vmatpush1.msra.mxu0 0.0
    %184 = vmatprep.subr.mxu0 0.0
    %185 = vmatpush1.msra.mxu0 0.0
    %186 = vmatprep.subr.mxu0 0.0
    %187 = vmatpush1.msra.mxu0 0.0
    %188 = vmatprep.subr.mxu0 0.0
    %189 = vmatpush1.msra.mxu0 0.0
    %190 = vmatprep.subr.mxu0 0.0
    %191 = vmatpush1.msra.mxu0 0.0
    %192 = vmatprep.subr.mxu0 0.0
    %193 = vmatpush1.msra.mxu0 %v156
    %194 = vmatprep.subr.mxu0 0.0
    %195 = vmatpush1.msra.mxu0 %v155
    %196 = vmatprep.subr.mxu0 0.0
    %197 = vmatpush1.msra.mxu0 %v154
    %198 = vmatprep.subr.mxu0 0.0
    %199 = vmatpush1.msra.mxu0 %v153
    %200 = vmatprep.subr.mxu0 0.0
    %201 = vmatpush2.msra.mxu0 0.0
    %202 = vmatprep.subr.mxu0 0.0
    %203 = vmatpush2.msra.mxu0 0.0
    %204 = vmatprep.subr.mxu0 0.0
    %205 = vmatpush2.msra.mxu0 0.0
    %206 = vmatprep.subr.mxu0 0.0
    %207 = vmatpush2.msra.mxu0 0.0
    %208 = vmatprep.subr.mxu0 0.0
    %209 = vmatpush2.msra.mxu0 0.0
    %210 = vmatprep.subr.mxu0 0.0
    %211 = vmatpush2.msra.mxu0 0.0
    %212 = vmatprep.subr.mxu0 0.0
    %213 = vmatpush2.msra.mxu0 0.0
    %214 = vmatprep.subr.mxu0 0.0
    %215 = vmatpush2.msra.mxu0 0.0
    %216 = vmatprep.subr.mxu0 0.0
    %217 = vmatpush2.msra.mxu0 0.0
    %218 = vmatprep.subr.mxu0 0.0
    %219 = vmatpush2.msra.mxu0 0.0
    %220 = vmatprep.subr.mxu0 0.0
    %221 = vmatpush2.msra.mxu0 0.0
    %222 = vmatprep.subr.mxu0 0.0
    %223 = vmatpush2.msra.mxu0 0.0
    %224 = vmatprep.subr.mxu0 0.0
    %225 = vmatpush2.msra.mxu0 0.0
    %226 = vmatprep.subr.mxu0 0.0
    %227 = vmatpush2.msra.mxu0 0.0
    %228 = vmatprep.subr.mxu0 0.0
    %229 = vmatpush2.msra.mxu0 0.0
    %230 = vmatprep.subr.mxu0 0.0
    %231 = vmatpush2.msra.mxu0 0.0
    %232 = vmatprep.mubr.f32.mxu0 0.0
    %233 = vmatmul.mubr.f32.gmra.mxu0 %v166
    %v234 = vpop.f32.mrf.mxu0
    %v235 = vadd.f32 %v162, %v234
    %v236 = vpop.f32.mrf.mxu0
    %237 = vdwg.mxu0
    %vm238 = vcmask 58368
    %239 = vst.msk [vmem:[#allocation2] sm:$0x3] %vm238, %v235
    // Predicated region
    $region22: #{tpu_custom_call.1} parent=1 // pred_check
      _
    $region23: #{tpu_custom_call.1} parent=1 // pred_check_branch
      %241 = sbr.rel (0) target = $region25
    $region24: #{tpu_custom_call.1} parent=1 // pred_region
      %s243 = ssub.s32 32, 32
      %244 = vsyncadd [#allocation3], %s243
      %s246 = sshll.u32 [#allocation2], 4
      %s247 = int_to_ptr.vmem [resolvable:$true] %s246
      %249 = dma.vmem_to_hbm [thread:$0]  %s247, 32, %s5, [#allocation3]
    $region25: #{tpu_custom_call.1} parent=1 // pred_fallthru
      _
    // Predicated region
    $region26: #{tpu_custom_call.1} parent=1 // pred_check
      _
    $region27: #{tpu_custom_call.1} parent=1 // pred_check_branch
      %251 = sbr.rel (0) target = $region29
    $region28: #{tpu_custom_call.1} parent=1 // pred_region
      %252 = dma.done [#allocation3], 32
    $region29: #{tpu_custom_call.1} parent=1 // pred_fallthru
      _
    %253 = vsyncpa [#allocation3], 1

</llo_original>
